<compile_context>
chip_gen: v6e
topology: v6e:2x2x1
jax: 0.10.0
libtpu: 0.0.40
codegen_flags: <defaults>
</compile_context>

<pallas_src>
import functools

import jax
import jax.numpy as jnp
from jax.experimental import pallas as pl
from jax.experimental.pallas import tpu as pltpu


def _channel_attn_kernel(x_ref, w1t_ref, b1_ref, w2t_ref, b2_ref, o_ref, *, hw_true):
    # x_ref: (Bt, C, HWp).  Weights already transposed to "right-multiply" form:
    #   w1t: (C, Ch), b1: (1, Ch), w2t: (Ch, C), b2: (1, C)
    x = x_ref[...]
    bt, c, hwp = x.shape

    if hwp == hw_true:
        ssum = jnp.sum(x.astype(jnp.float32), axis=-1)          # (Bt, C) f32 accumulation
        mx = jnp.max(x, axis=-1)                                 # (Bt, C)
    else:
        # lane-dense padding: mask the padded tail out of both reductions
        lane = jax.lax.broadcasted_iota(jnp.int32, (1, 1, hwp), 2)
        valid = lane < hw_true
        xf = x.astype(jnp.float32)
        ssum = jnp.sum(jnp.where(valid, xf, 0.0), axis=-1)
        mx = jnp.max(jnp.where(valid, xf, jnp.finfo(jnp.float32).min), axis=-1)

    avg = ssum * (1.0 / hw_true)                                 # AdaptiveAvgPool2d(1)
    # Fuse the avg- and max-branches: one matmul over (2*Bt, C) rows instead of two N=1 matmuls.
    v = jnp.concatenate([avg, mx.astype(jnp.float32)], axis=0)   # (2*Bt, C)

    h = jnp.dot(v, w1t_ref[...], preferred_element_type=jnp.float32) + b1_ref[...]   # (2*Bt, Ch)
    h = h * jax.nn.sigmoid(h)                                                         # SiLU
    s = jnp.dot(h, w2t_ref[...], preferred_element_type=jnp.float32) + b2_ref[...]    # (2*Bt, C)
    s = jax.nn.sigmoid(s)

    scale = (s[:bt] + s[bt:]).astype(x.dtype)                    # (Bt, C): sigmoid(fc(avg)) + sigmoid(fc(max))
    o_ref[...] = x * scale[:, :, None]


def _choose_batch_tile(batch, bytes_per_batch, target_bytes):
    """Largest divisor of `batch` whose block stays near target_bytes, keeping grid >= 2 when possible."""
    if batch <= 1 or bytes_per_batch >= target_bytes:
        return 1
    max_bt = max(1, int(target_bytes // bytes_per_batch))
    # keep at least 2 grid steps so both v7x TensorCores are used
    max_bt = min(max_bt, max(1, batch // 2))
    bt = 1
    for d in range(1, max_bt + 1):
        if batch % d == 0:
            bt = d
    return bt


def channel_attention(x, w1, b1, w2, b2, *, target_block_bytes=2 * 1024 * 1024):
    """x: (B, C, H, W). w1: (Ch, C), b1: (Ch,), w2: (C, Ch), b2: (C,) (PyTorch Linear convention).

    Returns x * (sigmoid(fc(avgpool(x))) + sigmoid(fc(maxpool(x)))) with the same shape/dtype as x.
    """
    B, C, H, W = x.shape
    HW = H * W
    HWp = ((HW + 127) // 128) * 128            # lane-dense last dim (unmasked vst)
    Ch = w1.shape[0]

    x_flat = x.reshape(B, C, HW)
    if HWp != HW:
        x_flat = jnp.pad(x_flat, ((0, 0), (0, 0), (0, HWp - HW)))

    itemsize = jnp.dtype(x.dtype).itemsize
    bytes_per_batch = C * HWp * itemsize
    bt = _choose_batch_tile(B, bytes_per_batch, target_block_bytes)
    assert B % bt == 0
    grid = (B // bt,)

    block_bytes = bt * bytes_per_batch
    # pipeline holds ~2 input + 2 output blocks (aliased, but budget conservatively) + weights
    vmem_limit_bytes = int(min(56 * 2**20, max(32 * 2**20, 5 * block_bytes + (2 << 20))))

    # Pre-transpose weights so the kernel right-multiplies (pooled rows on sublanes, C/Ch on lanes).
    w1t = w1.T.astype(jnp.float32)             # (C, Ch)
    w2t = w2.T.astype(jnp.float32)             # (Ch, C)
    b1r = b1.reshape(1, Ch).astype(jnp.float32)
    b2r = b2.reshape(1, C).astype(jnp.float32)

    kernel = functools.partial(_channel_attn_kernel, hw_true=HW)

    out_flat = pl.pallas_call(
        kernel,
        out_shape=jax.ShapeDtypeStruct((B, C, HWp), x.dtype),
        grid_spec=pltpu.PrefetchScalarGridSpec(
            num_scalar_prefetch=0,
            grid=grid,
            in_specs=[
                pl.BlockSpec((bt, C, HWp), lambda b: (b, 0, 0)),
                pl.BlockSpec((C, Ch), lambda b: (0, 0)),   # resident across the grid
                pl.BlockSpec((1, Ch), lambda b: (0, 0)),
                pl.BlockSpec((Ch, C), lambda b: (0, 0)),
                pl.BlockSpec((1, C), lambda b: (0, 0)),
            ],
            out_specs=pl.BlockSpec((bt, C, HWp), lambda b: (b, 0, 0)),
        ),
        compiler_params=pltpu.CompilerParams(
            dimension_semantics=("parallel",),
            vmem_limit_bytes=vmem_limit_bytes,
        ),
        input_output_aliases={0: 0},           # pure in-place rescale of x
    )(x_flat, w1t, b1r, w2t, b2r)

    if HWp != HW:
        out_flat = out_flat[:, :, :HW]
    return out_flat.reshape(B, C, H, W)


def _reference(x, w1, b1, w2, b2):
    avg = jnp.mean(x, axis=(2, 3))             # (B, C)
    mx = jnp.max(x, axis=(2, 3))               # (B, C)

    def fc(v):
        h = v @ w1.T + b1
        h = h * jax.nn.sigmoid(h)              # SiLU
        o = h @ w2.T + b2
        return jax.nn.sigmoid(o)

    scale = fc(avg) + fc(mx)                   # (B, C)
    return x * scale[:, :, None, None]


if __name__ == "__main__":
    B, C, H, W = 2, 16, 16, 16
    reduction = 8
    Ch = C // reduction

    key = jax.random.PRNGKey(0)
    kx, k1, k2, k3, k4 = jax.random.split(key, 5)

    x = jax.random.normal(kx, (B, C, H, W), dtype=jnp.float32)
    # PyTorch Linear convention: weight is (out_features, in_features).
    w1 = jax.random.normal(k1, (Ch, C), dtype=jnp.float32) * 0.2
    b1 = jax.random.normal(k2, (Ch,), dtype=jnp.float32) * 0.1
    w2 = jax.random.normal(k3, (C, Ch), dtype=jnp.float32) * 0.2
    b2 = jax.random.normal(k4, (C,), dtype=jnp.float32) * 0.1

    out = channel_attention(x, w1, b1, w2, b2)
    out = jax.block_until_ready(out)

    ref = _reference(x, w1, b1, w2, b2)
    assert out.shape == (B, C, H, W)
    assert jnp.allclose(out, ref, atol=1e-5, rtol=1e-5), "mismatch vs reference"

    print("KERNEL_OK")
</pallas_src>

<mosaic_0001>
module attributes {stable_mosaic.version = 11 : i64} {
  func.func @_channel_attn_kernel(%arg0: i32, %arg1: memref<1x16x256xf32, #tpu.memory_space<vmem>>, %arg2: memref<16x2xf32, #tpu.memory_space<vmem>>, %arg3: memref<1x2xf32, #tpu.memory_space<vmem>>, %arg4: memref<2x16xf32, #tpu.memory_space<vmem>>, %arg5: memref<1x16xf32, #tpu.memory_space<vmem>>, %arg6: memref<1x16x256xf32, #tpu.memory_space<vmem>>) attributes {dimension_semantics = [#tpu.dimension_semantics<parallel>], iteration_bounds = array<i64: 2>, scalar_prefetch = 0 : i64, scratch_operands = 0 : i64, tpu.core_type = #tpu.core_type<tc>, window_params = [{transform_indices = @transform_0, window_bounds = array<i64: 1, 16, 256>}, {pipeline_mode = #tpu.pipeline_mode<synchronous>, transform_indices = @transform_1, window_bounds = array<i64: 16, 2>}, {pipeline_mode = #tpu.pipeline_mode<synchronous>, transform_indices = @transform_2, window_bounds = array<i64: 1, 2>}, {pipeline_mode = #tpu.pipeline_mode<synchronous>, transform_indices = @transform_3, window_bounds = array<i64: 2, 16>}, {pipeline_mode = #tpu.pipeline_mode<synchronous>, transform_indices = @transform_4, window_bounds = array<i64: 1, 16>}, {transform_indices = @transform_5, window_bounds = array<i64: 1, 16, 256>}]} {
    %c0 = arith.constant 0 : index
    %c0_0 = arith.constant 0 : index
    %c0_1 = arith.constant 0 : index
    %0 = vector.load %arg1[%c0, %c0_0, %c0_1] : memref<1x16x256xf32, #tpu.memory_space<vmem>>, vector<1x16x256xf32>
    %cst = arith.constant dense<0.000000e+00> : vector<1x16xf32>
    %1 = vector.multi_reduction <add>, %0, %cst [2] : vector<1x16x256xf32> to vector<1x16xf32>
    %cst_2 = arith.constant dense<0xFF800000> : vector<1x16xf32>
    %2 = vector.multi_reduction <maximumf>, %0, %cst_2 [2] : vector<1x16x256xf32> to vector<1x16xf32>
    %cst_3 = arith.constant 3.906250e-03 : f32
    %3 = vector.broadcast %cst_3 : f32 to vector<1x16xf32>
    %4 = arith.mulf %1, %3 : vector<1x16xf32>
    %5 = tpu.concatenate %4, %2 in 0 : vector<1x16xf32>, vector<1x16xf32> -> vector<2x16xf32>
    %c0_4 = arith.constant 0 : index
    %c0_5 = arith.constant 0 : index
    %6 = vector.load %arg2[%c0_4, %c0_5] : memref<16x2xf32, #tpu.memory_space<vmem>>, vector<16x2xf32>
    %cst_6 = arith.constant dense<0.000000e+00> : vector<2x2xf32>
    %7 = tpu.matmul %5, %6, %cst_6 {dimension_numbers = #tpu.dot_dimension_numbers<[1], [0], [0], [1], [0, 0, 1, 1], [], []>} : vector<2x16xf32>, vector<16x2xf32>, vector<2x2xf32> -> vector<2x2xf32>
    %c0_7 = arith.constant 0 : index
    %c0_8 = arith.constant 0 : index
    %8 = vector.load %arg3[%c0_7, %c0_8] : memref<1x2xf32, #tpu.memory_space<vmem>>, vector<1x2xf32>
    %9 = vector.broadcast %8 : vector<1x2xf32> to vector<2x2xf32>
    %10 = arith.addf %7, %9 : vector<2x2xf32>
    %11 = arith.negf %10 : vector<2x2xf32>
    %12 = math.exp %11 : vector<2x2xf32>
    %cst_9 = arith.constant 1.000000e+00 : f32
    %13 = vector.broadcast %cst_9 : f32 to vector<2x2xf32>
    %14 = arith.addf %13, %12 : vector<2x2xf32>
    %15 = arith.divf %13, %14 : vector<2x2xf32>
    %16 = arith.mulf %10, %15 : vector<2x2xf32>
    %c0_10 = arith.constant 0 : index
    %c0_11 = arith.constant 0 : index
    %17 = vector.load %arg4[%c0_10, %c0_11] : memref<2x16xf32, #tpu.memory_space<vmem>>, vector<2x16xf32>
    %cst_12 = arith.constant dense<0.000000e+00> : vector<2x16xf32>
    %18 = tpu.matmul %16, %17, %cst_12 {dimension_numbers = #tpu.dot_dimension_numbers<[1], [0], [0], [1], [0, 0, 1, 1], [], []>} : vector<2x2xf32>, vector<2x16xf32>, vector<2x16xf32> -> vector<2x16xf32>
    %c0_13 = arith.constant 0 : index
    %c0_14 = arith.constant 0 : index
    %19 = vector.load %arg5[%c0_13, %c0_14] : memref<1x16xf32, #tpu.memory_space<vmem>>, vector<1x16xf32>
    %20 = vector.broadcast %19 : vector<1x16xf32> to vector<2x16xf32>
    %21 = arith.addf %18, %20 : vector<2x16xf32>
    %22 = arith.negf %21 : vector<2x16xf32>
    %23 = math.exp %22 : vector<2x16xf32>
    %cst_15 = arith.constant 1.000000e+00 : f32
    %24 = vector.broadcast %cst_15 : f32 to vector<2x16xf32>
    %25 = arith.addf %24, %23 : vector<2x16xf32>
    %26 = arith.divf %24, %25 : vector<2x16xf32>
    %27 = vector.extract_strided_slice %26 {offsets = [0, 0], sizes = [1, 16], strides = [1, 1]} : vector<2x16xf32> to vector<1x16xf32>
    %28 = vector.extract_strided_slice %26 {offsets = [1, 0], sizes = [1, 16], strides = [1, 1]} : vector<2x16xf32> to vector<1x16xf32>
    %29 = arith.addf %27, %28 : vector<1x16xf32>
    %30 = vector.shape_cast %29 : vector<1x16xf32> to vector<1x16x1xf32>
    %31 = vector.broadcast %30 : vector<1x16x1xf32> to vector<1x16x256xf32>
    %32 = arith.mulf %0, %31 : vector<1x16x256xf32>
    %c0_16 = arith.constant 0 : index
    %c0_17 = arith.constant 0 : index
    %c0_18 = arith.constant 0 : index
    %33 = vector.load %arg6[%c0_16, %c0_17, %c0_18] : memref<1x16x256xf32, #tpu.memory_space<vmem>>, vector<1x16x256xf32>
    tpu.vector_store %arg6[%c0_16, %c0_17, %c0_18], %32 {strides = array<i32>} : memref<1x16x256xf32, #tpu.memory_space<vmem>>, vector<1x16x256xf32>,
    return
  }
  func.func @transform_0(%arg0: i32) -> (i32, i32, i32) {
    %c0_i32 = arith.constant 0 : i32
    %c0_i32_0 = arith.constant 0 : i32
    %c0_i32_1 = arith.constant 0 : i32
    return %arg0, %c0_i32, %c0_i32_0 : i32, i32, i32
  }
  func.func @transform_1(%arg0: i32) -> (i32, i32) {
    %c0_i32 = arith.constant 0 : i32
    %c0_i32_0 = arith.constant 0 : i32
    %c0_i32_1 = arith.constant 0 : i32
    return %c0_i32, %c0_i32_0 : i32, i32
  }
  func.func @transform_2(%arg0: i32) -> (i32, i32) {
    %c0_i32 = arith.constant 0 : i32
    %c0_i32_0 = arith.constant 0 : i32
    %c0_i32_1 = arith.constant 0 : i32
    return %c0_i32, %c0_i32_0 : i32, i32
  }
  func.func @transform_3(%arg0: i32) -> (i32, i32) {
    %c0_i32 = arith.constant 0 : i32
    %c0_i32_0 = arith.constant 0 : i32
    %c0_i32_1 = arith.constant 0 : i32
    return %c0_i32, %c0_i32_0 : i32, i32
  }
  func.func @transform_4(%arg0: i32) -> (i32, i32) {
    %c0_i32 = arith.constant 0 : i32
    %c0_i32_0 = arith.constant 0 : i32
    %c0_i32_1 = arith.constant 0 : i32
    return %c0_i32, %c0_i32_0 : i32, i32
  }
  func.func @transform_5(%arg0: i32) -> (i32, i32, i32) {
    %c0_i32 = arith.constant 0 : i32
    %c0_i32_0 = arith.constant 0 : i32
    %c0_i32_1 = arith.constant 0 : i32
    return %arg0, %c0_i32, %c0_i32_0 : i32, i32, i32
  }
}

</mosaic_0001>

<llo_original>
// kernel: tpu_custom_call.1
$region0: #{tpu_custom_call.1}
  #allocation0 [shape = 'u32[]', space=smem, size = 0x4, offset = 0x4, fixed_abs, tag = 'smem constant byte address 0x4 - core index']
  #allocation1 [shape = 'u32[144,128]{1,0:T(1,128)}', space=vmem, size = 0x12000, scoped, tag = 'internal scratch']
  %s0 = inlined_call_operand.hbm [shape: f32[2,16,256], index: 0, kind: input, shape index: {}, may-alias: {0,5}]
  %s1 = inlined_call_operand.vmem [shape: f32[16,2], index: 1, kind: input, shape index: {}]
  %s2 = inlined_call_operand.vmem [shape: f32[1,2], index: 2, kind: input, shape index: {}]
  %s3 = inlined_call_operand.vmem [shape: f32[2,16], index: 3, kind: input, shape index: {}]
  %s4 = inlined_call_operand.vmem [shape: f32[1,16], index: 4, kind: input, shape index: {}]
  %s5 = inlined_call_operand.hbm [shape: f32[2,16,256], index: 5, kind: output, shape index: {}, may-alias: {0,5}]
  %s6 = sld [smem:[#allocation0]]
  $region57: #{tpu_custom_call.1} parent=0
    _
  %s8 = ssub.s32 1, %s6
  %s9 = scalar_select 0, %s8, %s6
  $region1: #{tpu_custom_call.1} parent=0
    #allocation2 [shape = 'u8[32768]{0}', space=vmem, size = 0x8000, scoped, tag = 'input window, operand 0']
    #allocation3 [shape = 's32[2]{0}', space=sflag, size = 0x8, scoped, tag = 'scoped memory for tpu_custom_call.1']
    #allocation4 [shape = 's32[2]{0}', space=sflag, size = 0x8, scoped, tag = 'scoped memory for tpu_custom_call.1']
    #allocation5 [shape = 'u8[32768]{0}', space=vmem, size = 0x8000, scoped, tag = 'output window, operand 0']
    %10 = vsyncpa [#allocation3], 0
    %s11 = scalar_lea.sflag [#allocation3], 1
    %12 = vsyncpa %s11, 0
    %13 = vsyncpa [#allocation4], 0
    %s14 = scalar_lea.sflag [#allocation4], 1
    %15 = vsyncpa %s14, 0
    loop: start=0, step=1, limit=4
    $region2: #{tpu_custom_call.1} parent=1 // loop_pre_header
      _
    $region3: #{tpu_custom_call.1} parent=1 // loop_header
      %s17 = sphi 0, %s21
      %p18 = scmp.ge.s32.totalorder %s17, 4
      %s27 = sphi 0, %s29
      %s30 = sphi 0, %s27
      %s31 = sphi 0, %s30
      %s47 = sphi 0, %s31
      %s51 = sphi 0, %s51
      %s53 = sphi 0, %s51
      %s54 = sphi 0, %s53
      %s68 = sphi 0, %s54
      %s72 = sphi 0, %s72
      %s74 = sphi 0, %s72
      %s75 = sphi 0, %s74
      %s89 = sphi 0, %s75
      %s93 = sphi 0, %s93
      %s95 = sphi 0, %s93
      %s96 = sphi 0, %s95
      %s110 = sphi 0, %s96
      %s114 = sphi 0, %s114
      %s116 = sphi 0, %s114
      %s117 = sphi 0, %s116
      %s131 = sphi 0, %s117
      %s137 = sphi 0, %s139
      %s140 = sphi 0, %s137
      %s141 = sphi 0, %s140
      %s157 = sphi 0, %s141
    $region4: #{tpu_custom_call.1} parent=1 // loop_header_branch
      %20 = sbr.rel (%p18) target = $region8
    $region5: #{tpu_custom_call.1} parent=1 // loop_body
      %s22 = ssub.s32 %s17, 1
      %s23 = ssub.s32 %s17, 2
      %s24 = sadd.s32 %s17, 1
      %s25 = ssub.s32 %s17, %s24
      %p26 = scmp.eq.s32.totalorder %s25, 0
      %s28 = sadd.s32 %s27, 1
      %s29 = scalar_select %p26, %s27, %s28
      %p32 = pneg %p26
      %p33 = scmp.eq.s32.totalorder %s17, 1
      %p34 = por %p32, %p33
      %p35 = scmp.ne.s32.totalorder %s27, %s30
      %p36 = scmp.eq.s32.totalorder %s17, 0
      %p37 = por %p35, %p36
      %p38 = scmp.ne.s32.totalorder %s27, %s30
      %p39 = scmp.eq.s32.totalorder %s22, 1
      %p40 = por %p38, %p39
      %p41 = scmp.ne.s32.totalorder %s30, %s31
      %p42 = scmp.eq.s32.totalorder %s22, 0
      %p43 = por %p41, %p42
      %p44 = scmp.ne.s32.totalorder %s30, %s31
      %p45 = scmp.eq.s32.totalorder %s23, 1
      %p46 = por %p44, %p45
      %p48 = scmp.ne.s32.totalorder %s31, %s47
      %p49 = scmp.eq.s32.totalorder %s23, 0
      %p50 = por %p48, %p49
      %s52 = sadd.s32 %s51, 1
      %p55 = scmp.eq.s32.totalorder %s17, 1
      %p56 = scmp.ne.s32.totalorder %s51, %s53
      %p57 = scmp.eq.s32.totalorder %s17, 0
      %p58 = por %p56, %p57
      %p59 = scmp.ne.s32.totalorder %s51, %s53
      %p60 = scmp.eq.s32.totalorder %s22, 1
      %p61 = por %p59, %p60
      %p62 = scmp.ne.s32.totalorder %s53, %s54
      %p63 = scmp.eq.s32.totalorder %s22, 0
      %p64 = por %p62, %p63
      %p65 = scmp.ne.s32.totalorder %s53, %s54
      %p66 = scmp.eq.s32.totalorder %s23, 1
      %p67 = por %p65, %p66
      %p69 = scmp.ne.s32.totalorder %s54, %s68
      %p70 = scmp.eq.s32.totalorder %s23, 0
      %p71 = por %p69, %p70
      %s73 = sadd.s32 %s72, 1
      %p76 = scmp.eq.s32.totalorder %s17, 1
      %p77 = scmp.ne.s32.totalorder %s72, %s74
      %p78 = scmp.eq.s32.totalorder %s17, 0
      %p79 = por %p77, %p78
      %p80 = scmp.ne.s32.totalorder %s72, %s74
      %p81 = scmp.eq.s32.totalorder %s22, 1
      %p82 = por %p80, %p81
      %p83 = scmp.ne.s32.totalorder %s74, %s75
      %p84 = scmp.eq.s32.totalorder %s22, 0
      %p85 = por %p83, %p84
      %p86 = scmp.ne.s32.totalorder %s74, %s75
      %p87 = scmp.eq.s32.totalorder %s23, 1
      %p88 = por %p86, %p87
      %p90 = scmp.ne.s32.totalorder %s75, %s89
      %p91 = scmp.eq.s32.totalorder %s23, 0
      %p92 = por %p90, %p91
      %s94 = sadd.s32 %s93, 1
      %p97 = scmp.eq.s32.totalorder %s17, 1
      %p98 = scmp.ne.s32.totalorder %s93, %s95
      %p99 = scmp.eq.s32.totalorder %s17, 0
      %p100 = por %p98, %p99
      %p101 = scmp.ne.s32.totalorder %s93, %s95
      %p102 = scmp.eq.s32.totalorder %s22, 1
      %p103 = por %p101, %p102
      %p104 = scmp.ne.s32.totalorder %s95, %s96
      %p105 = scmp.eq.s32.totalorder %s22, 0
      %p106 = por %p104, %p105
      %p107 = scmp.ne.s32.totalorder %s95, %s96
      %p108 = scmp.eq.s32.totalorder %s23, 1
      %p109 = por %p107, %p108
      %p111 = scmp.ne.s32.totalorder %s96, %s110
      %p112 = scmp.eq.s32.totalorder %s23, 0
      %p113 = por %p111, %p112
      %s115 = sadd.s32 %s114, 1
      %p118 = scmp.eq.s32.totalorder %s17, 1
      %p119 = scmp.ne.s32.totalorder %s114, %s116
      %p120 = scmp.eq.s32.totalorder %s17, 0
      %p121 = por %p119, %p120
      %p122 = scmp.ne.s32.totalorder %s114, %s116
      %p123 = scmp.eq.s32.totalorder %s22, 1
      %p124 = por %p122, %p123
      %p125 = scmp.ne.s32.totalorder %s116, %s117
      %p126 = scmp.eq.s32.totalorder %s22, 0
      %p127 = por %p125, %p126
      %p128 = scmp.ne.s32.totalorder %s116, %s117
      %p129 = scmp.eq.s32.totalorder %s23, 1
      %p130 = por %p128, %p129
      %p132 = scmp.ne.s32.totalorder %s117, %s131
      %p133 = scmp.eq.s32.totalorder %s23, 0
      %p134 = por %p132, %p133
      %s135 = ssub.s32 %s17, %s24
      %p136 = scmp.eq.s32.totalorder %s135, 0
      %s138 = sadd.s32 %s137, 1
      %s139 = scalar_select %p136, %s137, %s138
      %p142 = pneg %p136
      %p143 = scmp.eq.s32.totalorder %s17, 1
      %p144 = por %p142, %p143
      %p145 = scmp.ne.s32.totalorder %s137, %s140
      %p146 = scmp.eq.s32.totalorder %s17, 0
      %p147 = por %p145, %p146
      %p148 = scmp.ne.s32.totalorder %s137, %s140
      %p149 = scmp.eq.s32.totalorder %s22, 1
      %p150 = por %p148, %p149
      %p151 = scmp.ne.s32.totalorder %s140, %s141
      %p152 = scmp.eq.s32.totalorder %s22, 0
      %p153 = por %p151, %p152
      %p154 = scmp.ne.s32.totalorder %s140, %s141
      %p155 = scmp.eq.s32.totalorder %s23, 1
      %p156 = por %p154, %p155
      %p158 = scmp.ne.s32.totalorder %s141, %s157
      %p159 = scmp.eq.s32.totalorder %s23, 0
      %p160 = por %p158, %p159
      %p161 = scmp.le.s32.totalorder 1, %s17
      %p162 = scmp.lt.s32.totalorder %s17, 3
      %p163 = pnand %p161, %p162
      %p164 = pneg %p163
      // Predicated region
      $region9: #{tpu_custom_call.1} parent=5 // pred_check
        _
      $region10: #{tpu_custom_call.1} parent=5 // pred_check_branch
        %166 = sbr.rel (%p163) target = $region12
      $region11: #{tpu_custom_call.1} parent=5 // pred_region
        %s167 = ssub.s32 %s17, 1
        // Predicated region
        $region13: #{tpu_custom_call.1} parent=11 // pred_check
          %p168 = pneg %p64
        $region14: #{tpu_custom_call.1} parent=11 // pred_check_branch
          %170 = sbr.rel (%p168) target = $region16
        $region15: #{tpu_custom_call.1} parent=11 // pred_region
          _
        $region16: #{tpu_custom_call.1} parent=11 // pred_fallthru
          _
        // Predicated region
        $region17: #{tpu_custom_call.1} parent=11 // pred_check
          %p171 = pneg %p85
        $region18: #{tpu_custom_call.1} parent=11 // pred_check_branch
          %173 = sbr.rel (%p171) target = $region20
        $region19: #{tpu_custom_call.1} parent=11 // pred_region
          _
        $region20: #{tpu_custom_call.1} parent=11 // pred_fallthru
          _
        // Predicated region
        $region21: #{tpu_custom_call.1} parent=11 // pred_check
          %p174 = pneg %p106
        $region22: #{tpu_custom_call.1} parent=11 // pred_check_branch
          %176 = sbr.rel (%p174) target = $region24
        $region23: #{tpu_custom_call.1} parent=11 // pred_region
          _
        $region24: #{tpu_custom_call.1} parent=11 // pred_fallthru
          _
        // Predicated region
        $region25: #{tpu_custom_call.1} parent=11 // pred_check
          %p177 = pneg %p127
        $region26: #{tpu_custom_call.1} parent=11 // pred_check_branch
          %179 = sbr.rel (%p177) target = $region28
        $region27: #{tpu_custom_call.1} parent=11 // pred_region
          _
        $region28: #{tpu_custom_call.1} parent=11 // pred_fallthru
          _
      $region12: #{tpu_custom_call.1} parent=5 // pred_fallthru
        _
      %p180 = scmp.lt.s32.totalorder %s17, 2
      // Predicated region
      $region29: #{tpu_custom_call.1} parent=5 // pred_check
        %p181 = pneg %p180
      $region30: #{tpu_custom_call.1} parent=5 // pred_check_branch
        %183 = sbr.rel (%p181) target = $region32
      $region31: #{tpu_custom_call.1} parent=5 // pred_region
        // Predicated region
        $region33: #{tpu_custom_call.1} parent=31 // pred_check
          %p184 = pneg %p37
        $region34: #{tpu_custom_call.1} parent=31 // pred_check_branch
          %186 = sbr.rel (%p184) target = $region36
        $region35: #{tpu_custom_call.1} parent=31 // pred_region
          %s187 = sand.u32 %s27, 1
          %s188 = scalar_lea.sflag [#allocation3], %s187
          %s189 = sand.u32 %s27, 1
          %s190 = smul.addr %s189, 32
          %s191 = scalar_lea.vmem [#allocation2], %s190
          %s193 = ssub.s32 512, 512
          %194 = vsyncadd %s188, %s193
          %s195 = smul.addr %s17, 4
          %s196 = smul.addr %s195, 128
          %s197 = scalar_lea.hbm %s0, %s196
          %s198 = sshll.u32 %s191, 4
          %s199 = int_to_ptr.vmem [resolvable:$true] %s198
          %204 = dma.hbm_to_vmem [thread:$0]  %s197, 512, %s199, %s188, 256, 256, 16
        $region36: #{tpu_custom_call.1} parent=31 // pred_fallthru
          _
      $region32: #{tpu_custom_call.1} parent=5 // pred_fallthru
        _
      %p205 = scmp.le.s32.totalorder 1, %s17
      %p206 = scmp.lt.s32.totalorder %s17, 3
      %p207 = pnand %p205, %p206
      %p208 = pneg %p207
      // Predicated region
      $region37: #{tpu_custom_call.1} parent=5 // pred_check
        _
      $region38: #{tpu_custom_call.1} parent=5 // pred_check_branch
        %210 = sbr.rel (%p207) target = $region40
      $region39: #{tpu_custom_call.1} parent=5 // pred_region
        %s211 = ssub.s32 %s17, 1
        %s212 = sand.u32 %s30, 1
        %s213 = scalar_lea.sflag [#allocation3], %s212
        %s214 = sand.u32 %s30, 1
        %s215 = smul.addr %s214, 32
        %s216 = scalar_lea.vmem [#allocation2], %s215
        // Predicated region
        $region41: #{tpu_custom_call.1} parent=39 // pred_check
          %p217 = pneg %p43
        $region42: #{tpu_custom_call.1} parent=39 // pred_check_branch
          %219 = sbr.rel (%p217) target = $region44
        $region43: #{tpu_custom_call.1} parent=39 // pred_region
          %220 = dma.done %s213, 512
        $region44: #{tpu_custom_call.1} parent=39 // pred_fallthru
          _
        %s221 = sand.u32 %s30, 1
        %s222 = scalar_lea.sflag [#allocation3], %s221
        %s223 = sand.u32 %s30, 1
        %s224 = smul.addr %s223, 32
        %s225 = scalar_lea.vmem [#allocation2], %s224
        %p226 = pneg %p43
        %p227 = pneg %p40
        %p228 = pneg %p64
        %p229 = pneg %p61
        %p230 = pneg %p85
        %p231 = pneg %p82
        %p232 = pneg %p106
        %p233 = pneg %p103
        %p234 = pneg %p127
        %p235 = pneg %p124
        %p236 = pneg %p153
        %p237 = pneg %p150
        %s238 = sand.u32 %s140, 1
        %s239 = scalar_lea.sflag [#allocation4], %s238
        %s240 = sand.u32 %s140, 1
        %s241 = smul.addr %s240, 32
        %s242 = scalar_lea.vmem [#allocation5], %s241
        %v243 = vld [vmem:[%s216] sm:$0xff]
        %v244 = vld [vmem:[%s216 + $0x8] sm:$0xff]
        %v245 = vld [vmem:[%s216 + $0x10] sm:$0xff]
        %v246 = vld [vmem:[%s216 + $0x18] sm:$0xff]
        %v247 = vadd.f32 %v243, %v244
        %248 = vadd.xlane.f32.xlu0 %v247
        %v249 = vpop.xlane.xlu0 %248
        %v250 = vadd.f32 %v245, %v246
        %251 = vadd.xlane.f32.xlu0 %v250
        %v252 = vpop.xlane.xlu0 %251
        %v253 = vmax.f32 %v243, %v244
        %254 = vmax.xlane.f32.xlu0 %v253
        %v255 = vpop.xlane.xlu0 %254
        %v256 = vmax.f32 %v245, %v246
        %257 = vmax.xlane.f32.xlu0 %v256
        %v258 = vpop.xlane.xlu0 %257
        %v259 = vmul.f32 %v249, 0.00390625
        %v260 = vmul.f32 %v252, 0.00390625
        %v263 = vlaneseq
        %v264 = vand.u32 %v263, 127
        %v265 = vlaneseq
        %v266 = vshrl.u32 %v265, 7
        %v267 = vsub.s32 %v264, %v266
        %v268 = vrot.slane %v259, %v267
        %v269 = vadd.s32 %v264, 4294967288
        %v270 = vlaneseq
        %v271 = vshrl.u32 %v270, 7
        %v272 = vsub.s32 %v269, %v271
        %v273 = vrot.slane %v260, %v272
        %vm274 = vcmask 130112
        %v275 = vsel %vm274, %v273, %v268
        %v279 = vlaneseq
        %v280 = vshrl.u32 %v279, 7
        %v281 = vsub.s32 %v264, %v280
        %v282 = vrot.slane %v255, %v281
        %v283 = vlaneseq
        %v284 = vshrl.u32 %v283, 7
        %v285 = vsub.s32 %v269, %v284
        %v286 = vrot.slane %v258, %v285
        %v287 = vsel %vm274, %v286, %v282
        %vm289 = vcmask 1040384
        %v290 = vsel %vm289, %v275, %v287
        %v291 = vld [vmem:[%s1] sm:$0xff]
        %v292 = vld [vmem:[%s1 + $0x8] sm:$0xff]
        %v293 = vld [vmem:[%s2] sm:$0x1]
        %v295 = vlaneseq
        %v296 = vshrl.u32 %v295, 7
        %v297 = vsub.s32 0, %v296
        %v298 = vrot.slane %v293, %v297
        %vm300 = vcmask 130048
        %v302 = vsel %vm300, %v290, 0
        %304 = vmatprep.subr.mxu0 0.0
        %305 = vmatpush1.msra.mxu0 0.0
        %306 = vmatprep.subr.mxu0 0.0
        %307 = vmatpush1.msra.mxu0 0.0
        %308 = vmatprep.subr.mxu0 0.0
        %309 = vmatpush1.msra.mxu0 0.0
        %310 = vmatprep.subr.mxu0 0.0
        %311 = vmatpush1.msra.mxu0 0.0
        %312 = vmatprep.subr.mxu0 0.0
        %313 = vmatpush1.msra.mxu0 0.0
        %314 = vmatprep.subr.mxu0 0.0
        %315 = vmatpush1.msra.mxu0 0.0
        %316 = vmatprep.subr.mxu0 0.0
        %317 = vmatpush1.msra.mxu0 0.0
        %318 = vmatprep.subr.mxu0 0.0
        %319 = vmatpush1.msra.mxu0 0.0
        %320 = vmatprep.subr.mxu0 0.0
        %321 = vmatpush1.msra.mxu0 0.0
        %322 = vmatprep.subr.mxu0 0.0
        %323 = vmatpush1.msra.mxu0 0.0
        %324 = vmatprep.subr.mxu0 0.0
        %325 = vmatpush1.msra.mxu0 0.0
        %326 = vmatprep.subr.mxu0 0.0
        %327 = vmatpush1.msra.mxu0 0.0
        %328 = vmatprep.subr.mxu0 0.0
        %329 = vmatpush1.msra.mxu0 0.0
        %330 = vmatprep.subr.mxu0 0.0
        %331 = vmatpush1.msra.mxu0 0.0
        %332 = vmatprep.subr.mxu0 0.0
        %333 = vmatpush1.msra.mxu0 %v292
        %334 = vmatprep.subr.mxu0 0.0
        %335 = vmatpush1.msra.mxu0 %v291
        %336 = vmatprep.subr.mxu0 0.0
        %337 = vmatpush2.msra.mxu0 0.0
        %338 = vmatprep.subr.mxu0 0.0
        %339 = vmatpush2.msra.mxu0 0.0
        %340 = vmatprep.subr.mxu0 0.0
        %341 = vmatpush2.msra.mxu0 0.0
        %342 = vmatprep.subr.mxu0 0.0
        %343 = vmatpush2.msra.mxu0 0.0
        %344 = vmatprep.subr.mxu0 0.0
        %345 = vmatpush2.msra.mxu0 0.0
        %346 = vmatprep.subr.mxu0 0.0
        %347 = vmatpush2.msra.mxu0 0.0
        %348 = vmatprep.subr.mxu0 0.0
        %349 = vmatpush2.msra.mxu0 0.0
        %350 = vmatprep.subr.mxu0 0.0
        %351 = vmatpush2.msra.mxu0 0.0
        %352 = vmatprep.subr.mxu0 0.0
        %353 = vmatpush2.msra.mxu0 0.0
        %354 = vmatprep.subr.mxu0 0.0
        %355 = vmatpush2.msra.mxu0 0.0
        %356 = vmatprep.subr.mxu0 0.0
        %357 = vmatpush2.msra.mxu0 0.0
        %358 = vmatprep.subr.mxu0 0.0
        %359 = vmatpush2.msra.mxu0 0.0
        %360 = vmatprep.subr.mxu0 0.0
        %361 = vmatpush2.msra.mxu0 0.0
        %362 = vmatprep.subr.mxu0 0.0
        %363 = vmatpush2.msra.mxu0 0.0
        %364 = vmatprep.subr.mxu0 0.0
        %365 = vmatpush2.msra.mxu0 0.0
        %366 = vmatprep.subr.mxu0 0.0
        %367 = vmatpush2.msra.mxu0 0.0
        %368 = vmatprep.mubr.f32.mxu0 0.0
        %369 = vmatmul.mubr.f32.gmra.mxu0 %v302
        %v370 = vpop.f32.mrf.mxu0
        %v371 = vadd.f32 %v298, %v370
        %v372 = vpop.f32.mrf.mxu0
        %373 = vdwg.mxu0
        %v374 = vxor.u32 %v371, 2147483648
        %v375 = vmul.f32 %v374, 1.442695
        %v376 = vpow.pop %v375
        %v377 = vadd.f32 %v376, 1.0
        %v378 = vrcp.pop %v377
        %v379 = vmul.f32 1.0, %v378
        %v380 = vmul.f32 %v371, %v379
        %v381 = vld [vmem:[%s3] sm:$0x3]
        %v382 = vld [vmem:[%s4] sm:$0x1]
        %v384 = vlaneseq
        %v385 = vshrl.u32 %v384, 7
        %v386 = vsub.s32 0, %v385
        %v387 = vrot.slane %v382, %v386
        %vm389 = vcmask 15360
        %v391 = vsel %vm389, %v380, 0
        %vm393 = vcmask 1041408
        %v395 = vsel %vm393, %v381, 0
        %397 = vmatprep.subr.mxu0 0.0
        %398 = vmatpush1.msra.mxu0 0.0
        %399 = vmatprep.subr.mxu0 0.0
        %400 = vmatpush1.msra.mxu0 0.0
        %401 = vmatprep.subr.mxu0 0.0
        %402 = vmatpush1.msra.mxu0 0.0
        %403 = vmatprep.subr.mxu0 0.0
        %404 = vmatpush1.msra.mxu0 0.0
        %405 = vmatprep.subr.mxu0 0.0
        %406 = vmatpush1.msra.mxu0 0.0
        %407 = vmatprep.subr.mxu0 0.0
        %408 = vmatpush1.msra.mxu0 0.0
        %409 = vmatprep.subr.mxu0 0.0
        %410 = vmatpush1.msra.mxu0 0.0
        %411 = vmatprep.subr.mxu0 0.0
        %412 = vmatpush1.msra.mxu0 0.0
        %413 = vmatprep.subr.mxu0 0.0
        %414 = vmatpush1.msra.mxu0 0.0
        %415 = vmatprep.subr.mxu0 0.0
        %416 = vmatpush1.msra.mxu0 0.0
        %417 = vmatprep.subr.mxu0 0.0
        %418 = vmatpush1.msra.mxu0 0.0
        %419 = vmatprep.subr.mxu0 0.0
        %420 = vmatpush1.msra.mxu0 0.0
        %421 = vmatprep.subr.mxu0 0.0
        %422 = vmatpush1.msra.mxu0 0.0
        %423 = vmatprep.subr.mxu0 0.0
        %424 = vmatpush1.msra.mxu0 0.0
        %425 = vmatprep.subr.mxu0 0.0
        %426 = vmatpush1.msra.mxu0 0.0
        %427 = vmatprep.subr.mxu0 0.0
        %428 = vmatpush1.msra.mxu0 %v395
        %429 = vmatprep.subr.mxu0 0.0
        %430 = vmatpush2.msra.mxu0 0.0
        %431 = vmatprep.subr.mxu0 0.0
        %432 = vmatpush2.msra.mxu0 0.0
        %433 = vmatprep.subr.mxu0 0.0
        %434 = vmatpush2.msra.mxu0 0.0
        %435 = vmatprep.subr.mxu0 0.0
        %436 = vmatpush2.msra.mxu0 0.0
        %437 = vmatprep.subr.mxu0 0.0
        %438 = vmatpush2.msra.mxu0 0.0
        %439 = vmatprep.subr.mxu0 0.0
        %440 = vmatpush2.msra.mxu0 0.0
        %441 = vmatprep.subr.mxu0 0.0
        %442 = vmatpush2.msra.mxu0 0.0
        %443 = vmatprep.subr.mxu0 0.0
        %444 = vmatpush2.msra.mxu0 0.0
        %445 = vmatprep.subr.mxu0 0.0
        %446 = vmatpush2.msra.mxu0 0.0
        %447 = vmatprep.subr.mxu0 0.0
        %448 = vmatpush2.msra.mxu0 0.0
        %449 = vmatprep.subr.mxu0 0.0
        %450 = vmatpush2.msra.mxu0 0.0
        %451 = vmatprep.subr.mxu0 0.0
        %452 = vmatpush2.msra.mxu0 0.0
        %453 = vmatprep.subr.mxu0 0.0
        %454 = vmatpush2.msra.mxu0 0.0
        %455 = vmatprep.subr.mxu0 0.0
        %456 = vmatpush2.msra.mxu0 0.0
        %457 = vmatprep.subr.mxu0 0.0
        %458 = vmatpush2.msra.mxu0 0.0
        %459 = vmatprep.subr.mxu0 0.0
        %460 = vmatpush2.msra.mxu0 0.0
        %461 = vmatprep.mubr.f32.mxu0 0.0
        %462 = vmatmul.mubr.f32.gmra.mxu0 %v391
        %v463 = vpop.f32.mrf.mxu0
        %v464 = vadd.f32 %v387, %v463
        %v465 = vpop.f32.mrf.mxu0
        %466 = vdwg.mxu0
        %v467 = vxor.u32 %v464, 2147483648
        %v468 = vmul.f32 %v467, 1.442695
        %v469 = vpow.pop %v468
        %v470 = vadd.f32 %v469, 1.0
        %v471 = vrcp.pop %v470
        %v472 = vmul.f32 1.0, %v471
        %v474 = vrot.slane %v472, 1
        %v476 = vadd.f32 %v472, %v474
        %v477 = vlaneseq
        %v478 = vshrl.u32 %v477, 7
        %v479 = vsub.s32 0, %v478
        %v480 = vrot.slane %v476, %v479
        %482 = vbcast.lane.b32.xlu0 %v480, 256
        %v483 = vpop.permute.xlu0 %482
        %s485 = sor.u32 256, 8
        %486 = vbcast.lane.b32.xlu0 %v480, %s485
        %v487 = vpop.permute.xlu0 %486
        %v488 = vmul.f32 %v243, %v483
        %v489 = vmul.f32 %v244, %v483
        %v490 = vmul.f32 %v245, %v487
        %v491 = vmul.f32 %v246, %v487
        %492 = vst [vmem:[%s242] sm:$0xff] %v488
        %493 = vst [vmem:[%s242 + $0x8] sm:$0xff] %v489
        %494 = vst [vmem:[%s242 + $0x10] sm:$0xff] %v490
        %495 = vst [vmem:[%s242 + $0x18] sm:$0xff] %v491
        %s496 = sand.u32 %s140, 1
        %s497 = scalar_lea.sflag [#allocation4], %s496
        %s498 = sand.u32 %s140, 1
        %s499 = smul.addr %s498, 32
        %s500 = scalar_lea.vmem [#allocation5], %s499
        // Predicated region
        $region45: #{tpu_custom_call.1} parent=39 // pred_check
          %p501 = pneg %p150
        $region46: #{tpu_custom_call.1} parent=39 // pred_check_branch
          %503 = sbr.rel (%p501) target = $region48
        $region47: #{tpu_custom_call.1} parent=39 // pred_region
          %s505 = ssub.s32 512, 512
          %506 = vsyncadd %s497, %s505
          %s507 = smul.addr %s22, 4
          %s508 = smul.addr %s507, 128
          %s509 = scalar_lea.hbm %s5, %s508
          %s510 = sshll.u32 %s500, 4
          %s511 = int_to_ptr.vmem [resolvable:$true] %s510
          %516 = dma.vmem_to_hbm [thread:$0]  %s511, 512, %s509, %s497, 256, 256, 16
        $region48: #{tpu_custom_call.1} parent=39 // pred_fallthru
          _
      $region40: #{tpu_custom_call.1} parent=5 // pred_fallthru
        _
      %p517 = scmp.le.s32.totalorder 2, %s17
      // Predicated region
      $region49: #{tpu_custom_call.1} parent=5 // pred_check
        %p518 = pneg %p517
      $region50: #{tpu_custom_call.1} parent=5 // pred_check_branch
        %520 = sbr.rel (%p518) target = $region52
      $region51: #{tpu_custom_call.1} parent=5 // pred_region
        %s521 = ssub.s32 %s17, 2
        // Predicated region
        $region53: #{tpu_custom_call.1} parent=51 // pred_check
          %p522 = pneg %p156
        $region54: #{tpu_custom_call.1} parent=51 // pred_check_branch
          %524 = sbr.rel (%p522) target = $region56
        $region55: #{tpu_custom_call.1} parent=51 // pred_region
          %s525 = sand.u32 %s141, 1
          %s526 = scalar_lea.sflag [#allocation4], %s525
          %s527 = sand.u32 %s141, 1
          %s528 = smul.addr %s527, 32
          %s529 = scalar_lea.vmem [#allocation5], %s528
          %530 = dma.done %s526, 512
        $region56: #{tpu_custom_call.1} parent=51 // pred_fallthru
          _
      $region52: #{tpu_custom_call.1} parent=5 // pred_fallthru
        _
    $region6: #{tpu_custom_call.1} parent=1 // loop_footer
      %s21 = sadd.s32 1, %s17
    $region7: #{tpu_custom_call.1} parent=1 // loop_footer_branch
      %16 = sbr.rel target = $region3
    $region8: #{tpu_custom_call.1} parent=1 // loop_exit
      _
    %531 = vsyncpa [#allocation3], 1
    %s532 = scalar_lea.sflag [#allocation3], 1
    %533 = vsyncpa %s532, 1
    %534 = vsyncpa [#allocation4], 1
    %s535 = scalar_lea.sflag [#allocation4], 1
    %536 = vsyncpa %s535, 1

</llo_original>
